<compile_context>
chip_gen: v7x
topology: tpu7x:2x2x1
jax: 0.10.0
libtpu: 0.0.40
codegen_flags: <defaults>
</compile_context>

<pallas_src>
import jax
import jax.numpy as jnp
from jax.experimental import pallas as pl
from jax.experimental.pallas import tpu as pltpu

_LANES = 128
_TARGET_BLOCK_BYTES = 8 << 20   # 8 MiB per block: ~6% per-step overhead on v7x,
                                # better on v6e/v5e; amortizes the ~0.35 us/step cost.
_VMEM_LIMIT_BYTES = 48 << 20    # explicit budget: 8 MiB * 2 arrays * 2 buffers = 32 MiB
                                # used; 48 MiB leaves headroom and fits v7x's 64 MiB VMEM.


def _identity_copy_kernel(x_ref, o_ref):
    # TODO(synk): BaseNet.forward is abstract (raises NotImplementedError);
    # identity is the only well-defined base behavior, so the body is a copy.
    o_ref[...] = x_ref[...]


def base_net_forward(x):
    """Preferred path: zero-cost identity — move zero bytes (top review item)."""
    return x


@jax.jit
def base_net_forward_materialized(x):
    """Identity that materializes a fresh output buffer via a Pallas copy.

    x: [N, C, H, W] (NCHW, matching PyTorch). Returns same shape/dtype.
    """
    total = x.size
    itemsize = jnp.dtype(x.dtype).itemsize
    if total == 0 or total % _LANES != 0:
        # TODO(synk): non-lane-alignable element counts fall back to the
        # zero-cost identity rather than a lane-sparse / padded copy.
        return x

    rows = total // _LANES
    # Sublane granularity: 8 rows for 32-bit, 16 for bf16, 32 for int8/fp8.
    sub = max(8, 32 // itemsize)
    target_rows = max(sub, ((_TARGET_BLOCK_BYTES // (_LANES * itemsize)) // sub) * sub)
    block_rows = rows if rows <= target_rows else target_rows

    x2d = x.reshape(rows, _LANES)  # lane-dense 2D slab: last dim = 128 lanes
    bytes_accessed = 2 * total * itemsize  # one full read + one full write

    y2d = pl.pallas_call(
        _identity_copy_kernel,
        out_shape=jax.ShapeDtypeStruct((rows, _LANES), x.dtype),
        grid=(pl.cdiv(rows, block_rows),),
        in_specs=[pl.BlockSpec((block_rows, _LANES), lambda i: (i, 0))],
        out_specs=pl.BlockSpec((block_rows, _LANES), lambda i: (i, 0)),
        compiler_params=pltpu.CompilerParams(
            # 1D parallel axis: shards across both TensorCores on v7x;
            # measured no-op on single-TC v5e/v6e.
            dimension_semantics=("parallel",),
            vmem_limit_bytes=_VMEM_LIMIT_BYTES,
        ),
        cost_estimate=pl.CostEstimate(
            flops=0, transcendentals=0, bytes_accessed=bytes_accessed),
    )(x2d)
    return y2d.reshape(x.shape)


class BaseNetPallas:
    """JAX/Pallas mirror of models/backbone/base.py::BaseNet."""

    def __init__(self, *args, **kwargs):
        # No parameters in the reference __init__.
        self.features_size = 0

    def __call__(self, x, materialize=False):
        if materialize:
            return base_net_forward_materialized(x)
        return base_net_forward(x)


if __name__ == "__main__":
    key = jax.random.PRNGKey(0)
    x = jax.random.normal(key, (2, 4, 16, 16), dtype=jnp.float32)  # NCHW

    net = BaseNetPallas()

    # Default (recommended) path: zero-cost identity, zero bytes moved.
    y_fast = net(x)
    jax.block_until_ready(y_fast)
    assert y_fast.shape == x.shape and y_fast.dtype == x.dtype
    assert bool(jnp.allclose(y_fast, x))

    # Materializing path: exercise the Pallas copy kernel once.
    y_copy = net(x, materialize=True)
    jax.block_until_ready(y_copy)
    assert y_copy.shape == x.shape and y_copy.dtype == x.dtype
    assert bool(jnp.allclose(y_copy, x))

    print("KERNEL_OK")
</pallas_src>

<mosaic_0001>
module attributes {stable_mosaic.version = 11 : i64} {
  func.func @_identity_copy_kernel(%arg0: i32, %arg1: memref<16x128xf32, #tpu.memory_space<vmem>>, %arg2: memref<16x128xf32, #tpu.memory_space<vmem>>) attributes {dimension_semantics = [#tpu.dimension_semantics<parallel>], iteration_bounds = array<i64: 1>, scalar_prefetch = 0 : i64, scratch_operands = 0 : i64, tpu.core_type = #tpu.core_type<tc>, window_params = [{transform_indices = @transform_0, window_bounds = array<i64: 16, 128>}, {transform_indices = @transform_1, window_bounds = array<i64: 16, 128>}]} {
    %c0 = arith.constant 0 : index
    %c0_0 = arith.constant 0 : index
    %0 = vector.load %arg1[%c0, %c0_0] : memref<16x128xf32, #tpu.memory_space<vmem>>, vector<16x128xf32>
    %c0_1 = arith.constant 0 : index
    %c0_2 = arith.constant 0 : index
    %1 = vector.load %arg2[%c0_1, %c0_2] : memref<16x128xf32, #tpu.memory_space<vmem>>, vector<16x128xf32>
    tpu.vector_store %arg2[%c0_1, %c0_2], %0 {strides = array<i32>} : memref<16x128xf32, #tpu.memory_space<vmem>>, vector<16x128xf32>,
    return
  }
  func.func @transform_0(%arg0: i32) -> (i32, i32) {
    %c0_i32 = arith.constant 0 : i32
    %c0_i32_0 = arith.constant 0 : i32
    return %arg0, %c0_i32 : i32, i32
  }
  func.func @transform_1(%arg0: i32) -> (i32, i32) {
    %c0_i32 = arith.constant 0 : i32
    %c0_i32_0 = arith.constant 0 : i32
    return %arg0, %c0_i32 : i32, i32
  }
}

</mosaic_0001>

<llo_original>
// kernel: base_net_forward_materialized.1
$region0: #{base_net_forward_materialized.1}
  #allocation0 [shape = 'u32[]', space=smem, size = 0x4, offset = 0x4, fixed_abs, tag = 'smem constant byte address 0x4 - core index']
  #allocation1 [shape = 'u32[144,128]{1,0:T(1,128)}', space=vmem, size = 0x12000, scoped, tag = 'internal scratch']
  %s0 = inlined_call_operand.vmem [shape: f32[16,128], index: 0, kind: input, shape index: {}]
  %s1 = inlined_call_operand.vmem [shape: f32[16,128], index: 1, kind: output, shape index: {}]
  %s2 = sld [smem:[#allocation0]]
  $region14: #{base_net_forward_materialized.1} parent=0
    _
  %s4 = ssub.s32 1, %s2
  %s5 = scalar_select 0, %s4, %s2
  // Predicated region
  $region2: #{base_net_forward_materialized.1} parent=0 // pred_check
    _
  $region3: #{base_net_forward_materialized.1} parent=0 // pred_check_branch
    %7 = sbr.rel (0) target = $region5
  $region4: #{base_net_forward_materialized.1} parent=0 // pred_region
    _
  $region5: #{base_net_forward_materialized.1} parent=0 // pred_fallthru
    _
  %v8 = vld [vmem:[%s0] sm:$0xff]
  %v9 = vld [vmem:[%s0 + $0x8] sm:$0xff]
  %10 = vst [vmem:[%s1] sm:$0xff] %v8
  %11 = vst [vmem:[%s1 + $0x8] sm:$0xff] %v9
  // Predicated region
  $region6: #{base_net_forward_materialized.1} parent=0 // pred_check
    _
  $region7: #{base_net_forward_materialized.1} parent=0 // pred_check_branch
    %13 = sbr.rel (0) target = $region9
  $region8: #{base_net_forward_materialized.1} parent=0 // pred_region
    _
  $region9: #{base_net_forward_materialized.1} parent=0 // pred_fallthru
    _
  // Predicated region
  $region10: #{base_net_forward_materialized.1} parent=0 // pred_check
    _
  $region11: #{base_net_forward_materialized.1} parent=0 // pred_check_branch
    %15 = sbr.rel (0) target = $region13
  $region12: #{base_net_forward_materialized.1} parent=0 // pred_region
    _
  $region13: #{base_net_forward_materialized.1} parent=0 // pred_fallthru
    _

</llo_original>
